<compile_context>
chip_gen: v5e
topology: v5e:2x2
jax: 0.10.0
libtpu: 0.0.40
codegen_flags: <defaults>
</compile_context>

<pallas_src>
from functools import partial

import jax
import jax.numpy as jnp
from jax.experimental import pallas as pl
from jax.experimental.pallas import tpu as pltpu


def lstm_tagger_kernel(x_ref, wih_ref, whh_ref, b_ref, wtag_ref, btag_ref,
                       out_ref, hs_ref):
    """One tile of TB sentences per grid step.

    x_ref:    (S, TB, E) f32, sequence-major embeddings.
    wih_ref:  (E, 4H) f32   (gate columns ordered [i, f, o, g]).
    whh_ref:  (H, 4H) bf16  (same column order).
    b_ref:    (1, 4H) f32   (b_ih + b_hh folded, same order).
    wtag_ref: (H, Tp) f32   (Tp = tag dim padded to a multiple of 128).
    btag_ref: (1, Tp) f32   (-1e30 in padded columns).
    out_ref:  (S, TB, Tp) f32 log-probabilities.
    hs_ref:   (S, TB, H) f32 scratch holding all hidden states.
    """
    S, TB, _ = x_ref.shape
    H = whh_ref.shape[0]
    H3 = 3 * H

    # Hoisted input projection: one MXU contraction over the embedding dim for
    # the whole (S, TB) tile -- the serial per-step path is only h @ W_hh.
    x_proj = jax.lax.dot_general(
        x_ref[...], wih_ref[...], (((2,), (0,)), ((), ())),
        preferred_element_type=jnp.float32) + b_ref[...]          # (S, TB, 4H)

    whh_bf = whh_ref[...]                                         # load once, reuse (bf16)

    h = jnp.zeros((TB, H), jnp.float32)                           # self.hidden = zeros
    c = jnp.zeros((TB, H), jnp.float32)

    # S is small and static: fully unroll the recurrence (static slices/stores).
    for t in range(S):
        # bf16 operands on the serial critical-path matmul; f32 accumulation.
        gates = x_proj[t] + jnp.dot(h.astype(jnp.bfloat16), whh_bf,
                                    preferred_element_type=jnp.float32)  # (TB, 4H)
        # Columns are [i, f, o | g]: one sigmoid over 3H lanes, one tanh over H.
        sig = jax.nn.sigmoid(gates[:, :H3])
        g_g = jnp.tanh(gates[:, H3:])
        i_g = sig[:, 0 * H:1 * H]
        f_g = sig[:, 1 * H:2 * H]
        o_g = sig[:, 2 * H:H3]
        c = f_g * c + i_g * g_g
        h = o_g * jnp.tanh(c)
        hs_ref[t] = h                                              # dense (TB, H) slab store

    # hidden2tag on the whole tile + log_softmax over the (padded) tag axis.
    # Padded columns carry -1e30 bias -> exp() == 0 -> normalizer untouched.
    tag_space = jax.lax.dot_general(
        hs_ref[...], wtag_ref[...], (((2,), (0,)), ((), ())),
        preferred_element_type=jnp.float32) + btag_ref[...]       # (S, TB, Tp)
    m = jnp.max(tag_space, axis=-1, keepdims=True)
    z = tag_space - m
    lse = jnp.log(jnp.sum(jnp.exp(z), axis=-1, keepdims=True))
    out_ref[...] = z - lse                                        # lane-dense (Tp = k*128) store


def prepare_params(w_ih, w_hh, b_ih, b_hh, w_tag, b_tag):
    """One-time host-side layout prep (hoisted out of the per-call path).

    PyTorch shapes: w_ih (4H, E), w_hh (4H, H), b_ih/b_hh (4H,),
    w_tag (T, H), b_tag (T,).  Returns weights with gate columns reordered to
    [i, f, o, g], W_hh in bf16, and the tag head zero/-1e30 padded to a
    lane-dense multiple of 128 columns."""
    H = w_hh.shape[1]
    T = w_tag.shape[0]
    # PyTorch row order [i, f, g, o] -> [i, f, o, g].
    perm = jnp.concatenate([jnp.arange(0, 2 * H),
                            jnp.arange(3 * H, 4 * H),
                            jnp.arange(2 * H, 3 * H)])
    w_ih = jnp.asarray(w_ih, jnp.float32)[perm]
    w_hh = jnp.asarray(w_hh, jnp.float32)[perm]
    b = (jnp.asarray(b_ih, jnp.float32) + jnp.asarray(b_hh, jnp.float32))[perm]

    wih_t = w_ih.T                                                 # (E, 4H) f32
    whh_t = w_hh.T.astype(jnp.bfloat16)                            # (H, 4H) bf16 (recurrence MXU)
    b = b.reshape(1, 4 * H)

    # Pad tag dim to a multiple of 128 lanes.
    Tp = ((T + 127) // 128) * 128
    wtag_p = jnp.zeros((H, Tp), jnp.float32).at[:, :T].set(
        jnp.asarray(w_tag, jnp.float32).T)
    btag_p = jnp.full((1, Tp), -1e30, jnp.float32).at[0, :T].set(
        jnp.asarray(b_tag, jnp.float32))
    return wih_t, whh_t, b, wtag_p, btag_p


@partial(jax.jit, static_argnames=("tagset_size", "tile_b"))
def lstm_tagger_forward_batched(embeds, wih_t, whh_t, b, wtag_p, btag_p, *,
                                tagset_size, tile_b=8):
    """embeds: (B, S, E) f32 -> (B, S, T) log-probs.

    tile_b sentences per grid step; for real workloads use tile_b=128-512
    (VMEM is nowhere near a constraint at these sizes), keeping >= 2 grid
    steps so both v7x TensorCores are used."""
    B, S, E = embeds.shape
    H = whh_t.shape[0]
    Tp = wtag_p.shape[1]

    TB = max(1, min(tile_b, B))
    Bp = ((B + TB - 1) // TB) * TB

    # Sequence-major layout so per-step slices/stores are dense (TB, .) slabs.
    x = jnp.transpose(embeds.astype(jnp.float32), (1, 0, 2))      # (S, B, E)
    if Bp != B:
        x = jnp.pad(x, ((0, 0), (0, Bp - B), (0, 0)))              # zero-pad batch tail

    grid_spec = pltpu.PrefetchScalarGridSpec(
        num_scalar_prefetch=0,
        grid=(Bp // TB,),
        in_specs=[
            pl.BlockSpec((S, TB, E), lambda bb: (0, bb, 0)),       # per-tile sentences
            pl.BlockSpec((E, 4 * H), lambda bb: (0, 0)),           # weights: same block
            pl.BlockSpec((H, 4 * H), lambda bb: (0, 0)),           #  every iter -> no re-DMA
            pl.BlockSpec((1, 4 * H), lambda bb: (0, 0)),
            pl.BlockSpec((H, Tp), lambda bb: (0, 0)),
            pl.BlockSpec((1, Tp), lambda bb: (0, 0)),
        ],
        out_specs=pl.BlockSpec((S, TB, Tp), lambda bb: (0, bb, 0)),
        scratch_shapes=[pltpu.VMEM((S, TB, H), jnp.float32)],
    )
    out = pl.pallas_call(
        lstm_tagger_kernel,
        out_shape=jax.ShapeDtypeStruct((S, Bp, Tp), jnp.float32),
        grid_spec=grid_spec,
        compiler_params=pltpu.CompilerParams(
            dimension_semantics=("parallel",)),
    )(x, wih_t, whh_t, b, wtag_p, btag_p)

    # Layout plumbing back to module order + drop tag padding / batch padding.
    return jnp.transpose(out, (1, 0, 2))[:B, :, :tagset_size]


def lstm_tagger_forward(embeds, params, tagset_size):
    """Module-equivalent forward: embeds (S, E) -> (S, T) log-probabilities."""
    return lstm_tagger_forward_batched(embeds[None], *params,
                                       tagset_size=tagset_size, tile_b=1)[0]


def lstm_tagger_ref(embeds, w_ih, w_hh, b_ih, b_hh, w_tag, b_tag):
    """Plain-JAX f32 reference of LSTMTagger.forward (post-embedding)."""
    S, _ = embeds.shape
    H = w_hh.shape[1]
    h = jnp.zeros((H,), jnp.float32)
    c = jnp.zeros((H,), jnp.float32)
    hs = []
    for t in range(S):
        gates = w_ih @ embeds[t] + w_hh @ h + b_ih + b_hh          # (4H,), order [i,f,g,o]
        i = jax.nn.sigmoid(gates[0 * H:1 * H])
        f = jax.nn.sigmoid(gates[1 * H:2 * H])
        g = jnp.tanh(gates[2 * H:3 * H])
        o = jax.nn.sigmoid(gates[3 * H:4 * H])
        c = f * c + i * g
        h = o * jnp.tanh(c)
        hs.append(h)
    tag_space = jnp.stack(hs) @ w_tag.T + b_tag
    return jax.nn.log_softmax(tag_space, axis=-1)


if __name__ == "__main__":
    # Small, deterministic setup consistent with LSTMTagger.__init__
    embedding_dim, hidden_dim, vocab_size, tagset_size = 32, 32, 50, 8
    seq_len, batch, tile_b = 8, 16, 8        # grid = 2 parallel steps (uses both v7x TCs)

    key = jax.random.PRNGKey(0)
    k_emb, k_wih, k_whh, k_bih, k_bhh, k_wt, k_bt, k_sent = jax.random.split(key, 8)

    scale = 1.0 / jnp.sqrt(jnp.float32(hidden_dim))
    # Embedding table ~ N(0, 1) as in nn.Embedding
    emb_table = jax.random.normal(k_emb, (vocab_size, embedding_dim), jnp.float32)
    # LSTM params ~ U(-1/sqrt(H), 1/sqrt(H)) as in nn.LSTM
    w_ih = jax.random.uniform(k_wih, (4 * hidden_dim, embedding_dim),
                              jnp.float32, -scale, scale)
    w_hh = jax.random.uniform(k_whh, (4 * hidden_dim, hidden_dim),
                              jnp.float32, -scale, scale)
    b_ih = jax.random.uniform(k_bih, (4 * hidden_dim,), jnp.float32, -scale, scale)
    b_hh = jax.random.uniform(k_bhh, (4 * hidden_dim,), jnp.float32, -scale, scale)
    # hidden2tag Linear params
    w_tag = jax.random.uniform(k_wt, (tagset_size, hidden_dim),
                               jnp.float32, -scale, scale)
    b_tag = jax.random.uniform(k_bt, (tagset_size,), jnp.float32, -scale, scale)

    # Input: integer token ids. The embedding lookup is glue (gather) in plain
    # JAX; the LSTM recurrence, linear head and log_softmax run in the kernel.
    # TODO(synk): fold the embedding gather into the kernel with a scalar-prefetch
    # Element-indexed BlockSpec if the vocab ever needs to stay in HBM.
    sentences = jax.random.randint(k_sent, (batch, seq_len), 0, vocab_size, jnp.int32)
    embeds = jnp.take(emb_table, sentences, axis=0)                # (B, S, E)

    params = prepare_params(w_ih, w_hh, b_ih, b_hh, w_tag, b_tag)

    # Module-equivalent single-sentence forward.
    tag_scores = lstm_tagger_forward(embeds[0], params, tagset_size)
    tag_scores = jax.block_until_ready(tag_scores)
    assert tag_scores.shape == (seq_len, tagset_size)
    assert bool(jnp.all(jnp.isfinite(tag_scores)))
    row_sums = jnp.sum(jnp.exp(tag_scores), axis=-1)
    assert bool(jnp.all(jnp.abs(row_sums - 1.0) < 1e-4))

    # Numerical cross-check against the plain-JAX f32 reference.  The serial
    # recurrence matmul uses bf16 operands (f32 accumulation), so allow a
    # slightly looser tolerance than a pure-f32 kernel.
    ref = lstm_tagger_ref(embeds[0], w_ih, w_hh, b_ih, b_hh, w_tag, b_tag)
    assert bool(jnp.all(jnp.abs(tag_scores - ref) < 5e-2))

    # Batched path (TB sentences per grid step, parallel grid axis).
    tag_scores_b = jax.block_until_ready(
        lstm_tagger_forward_batched(embeds, *params,
                                    tagset_size=tagset_size, tile_b=tile_b))
    assert tag_scores_b.shape == (batch, seq_len, tagset_size)
    assert bool(jnp.all(jnp.isfinite(tag_scores_b)))
    assert bool(jnp.all(jnp.abs(tag_scores_b[0] - tag_scores) < 1e-3))
    ref_b = lstm_tagger_ref(embeds[5], w_ih, w_hh, b_ih, b_hh, w_tag, b_tag)
    assert bool(jnp.all(jnp.abs(tag_scores_b[5] - ref_b) < 5e-2))

    print("KERNEL_OK")
</pallas_src>

<mosaic_0001>
module attributes {stable_mosaic.version = 11 : i64} {
  func.func @lstm_tagger_kernel(%arg0: i32, %arg1: memref<8x1x32xf32, #tpu.memory_space<vmem>>, %arg2: memref<32x128xf32, #tpu.memory_space<vmem>>, %arg3: memref<32x128xbf16, #tpu.memory_space<vmem>>, %arg4: memref<1x128xf32, #tpu.memory_space<vmem>>, %arg5: memref<32x128xf32, #tpu.memory_space<vmem>>, %arg6: memref<1x128xf32, #tpu.memory_space<vmem>>, %arg7: memref<8x1x128xf32, #tpu.memory_space<vmem>>, %arg8: memref<8x1x32xf32, #tpu.memory_space<vmem>>) attributes {dimension_semantics = [#tpu.dimension_semantics<parallel>], iteration_bounds = array<i64: 1>, scalar_prefetch = 0 : i64, scratch_operands = 1 : i64, tpu.core_type = #tpu.core_type<tc>, window_params = [{transform_indices = @transform_0, window_bounds = array<i64: 8, 1, 32>}, {pipeline_mode = #tpu.pipeline_mode<synchronous>, transform_indices = @transform_1, window_bounds = array<i64: 32, 128>}, {pipeline_mode = #tpu.pipeline_mode<synchronous>, transform_indices = @transform_2, window_bounds = array<i64: 32, 128>}, {pipeline_mode = #tpu.pipeline_mode<synchronous>, transform_indices = @transform_3, window_bounds = array<i64: 1, 128>}, {pipeline_mode = #tpu.pipeline_mode<synchronous>, transform_indices = @transform_4, window_bounds = array<i64: 32, 128>}, {pipeline_mode = #tpu.pipeline_mode<synchronous>, transform_indices = @transform_5, window_bounds = array<i64: 1, 128>}, {transform_indices = @transform_6, window_bounds = array<i64: 8, 1, 128>}]} {
    %c0 = arith.constant 0 : index
    %c0_0 = arith.constant 0 : index
    %c0_1 = arith.constant 0 : index
    %0 = vector.load %arg1[%c0, %c0_0, %c0_1] : memref<8x1x32xf32, #tpu.memory_space<vmem>>, vector<8x1x32xf32>
    %c0_2 = arith.constant 0 : index
    %c0_3 = arith.constant 0 : index
    %1 = vector.load %arg2[%c0_2, %c0_3] : memref<32x128xf32, #tpu.memory_space<vmem>>, vector<32x128xf32>
    %cst = arith.constant dense<0.000000e+00> : vector<8x1x128xf32>
    %2 = tpu.matmul %0, %1, %cst {dimension_numbers = #tpu.dot_dimension_numbers<[2], [0], [0, 1], [1], [0, 0, 0, 1, 1, 1], [], []>} : vector<8x1x32xf32>, vector<32x128xf32>, vector<8x1x128xf32> -> vector<8x1x128xf32>
    %c0_4 = arith.constant 0 : index
    %c0_5 = arith.constant 0 : index
    %3 = vector.load %arg4[%c0_4, %c0_5] : memref<1x128xf32, #tpu.memory_space<vmem>>, vector<1x128xf32>
    %4 = vector.shape_cast %3 : vector<1x128xf32> to vector<1x1x128xf32>
    %5 = vector.broadcast %4 : vector<1x1x128xf32> to vector<8x1x128xf32>
    %6 = arith.addf %2, %5 : vector<8x1x128xf32>
    %c0_6 = arith.constant 0 : index
    %c0_7 = arith.constant 0 : index
    %7 = vector.load %arg3[%c0_6, %c0_7] : memref<32x128xbf16, #tpu.memory_space<vmem>>, vector<32x128xbf16>
    %cst_8 = arith.constant 0.000000e+00 : f32
    %8 = vector.broadcast %cst_8 : f32 to vector<1x32xf32>
    %cst_9 = arith.constant 0.000000e+00 : f32
    %9 = vector.broadcast %cst_9 : f32 to vector<1x32xf32>
    %10 = vector.extract_strided_slice %6 {offsets = [0, 0, 0], sizes = [1, 1, 128], strides = [1, 1, 1]} : vector<8x1x128xf32> to vector<1x1x128xf32>
    %11 = vector.shape_cast %10 : vector<1x1x128xf32> to vector<1x128xf32>
    %12 = arith.truncf %8 : vector<1x32xf32> to vector<1x32xbf16>
    %cst_10 = arith.constant dense<0.000000e+00> : vector<1x128xf32>
    %13 = tpu.matmul %12, %7, %cst_10 {dimension_numbers = #tpu.dot_dimension_numbers<[1], [0], [0], [1], [0, 0, 1, 1], [], []>} : vector<1x32xbf16>, vector<32x128xbf16>, vector<1x128xf32> -> vector<1x128xf32>
    %14 = arith.addf %11, %13 : vector<1x128xf32>
    %15 = vector.extract_strided_slice %14 {offsets = [0, 0], sizes = [1, 96], strides = [1, 1]} : vector<1x128xf32> to vector<1x96xf32>
    %16 = arith.negf %15 : vector<1x96xf32>
    %17 = math.exp %16 : vector<1x96xf32>
    %cst_11 = arith.constant 1.000000e+00 : f32
    %18 = vector.broadcast %cst_11 : f32 to vector<1x96xf32>
    %19 = arith.addf %18, %17 : vector<1x96xf32>
    %20 = arith.divf %18, %19 : vector<1x96xf32>
    %21 = vector.extract_strided_slice %14 {offsets = [0, 96], sizes = [1, 32], strides = [1, 1]} : vector<1x128xf32> to vector<1x32xf32>
    %22 = math.tanh %21 : vector<1x32xf32>
    %23 = vector.extract_strided_slice %20 {offsets = [0, 0], sizes = [1, 32], strides = [1, 1]} : vector<1x96xf32> to vector<1x32xf32>
    %24 = vector.extract_strided_slice %20 {offsets = [0, 32], sizes = [1, 32], strides = [1, 1]} : vector<1x96xf32> to vector<1x32xf32>
    %25 = vector.extract_strided_slice %20 {offsets = [0, 64], sizes = [1, 32], strides = [1, 1]} : vector<1x96xf32> to vector<1x32xf32>
    %26 = arith.mulf %24, %9 : vector<1x32xf32>
    %27 = arith.mulf %23, %22 : vector<1x32xf32>
    %28 = arith.addf %26, %27 : vector<1x32xf32>
    %29 = math.tanh %28 : vector<1x32xf32>
    %30 = arith.mulf %25, %29 : vector<1x32xf32>
    %c0_12 = arith.constant 0 : index
    %c0_13 = arith.constant 0 : index
    %c0_14 = arith.constant 0 : index
    %31 = vector.load %arg8[%c0_12, %c0_13, %c0_14] : memref<8x1x32xf32, #tpu.memory_space<vmem>>, vector<1x1x32xf32>
    %32 = vector.shape_cast %31 : vector<1x1x32xf32> to vector<1x32xf32>
    %33 = vector.shape_cast %30 : vector<1x32xf32> to vector<1x1x32xf32>
    tpu.vector_store %arg8[%c0_12, %c0_13, %c0_14], %33 {strides = array<i32>} : memref<8x1x32xf32, #tpu.memory_space<vmem>>, vector<1x1x32xf32>,
    %34 = vector.extract_strided_slice %6 {offsets = [1, 0, 0], sizes = [1, 1, 128], strides = [1, 1, 1]} : vector<8x1x128xf32> to vector<1x1x128xf32>
    %35 = vector.shape_cast %34 : vector<1x1x128xf32> to vector<1x128xf32>
    %36 = arith.truncf %30 : vector<1x32xf32> to vector<1x32xbf16>
    %cst_15 = arith.constant dense<0.000000e+00> : vector<1x128xf32>
    %37 = tpu.matmul %36, %7, %cst_15 {dimension_numbers = #tpu.dot_dimension_numbers<[1], [0], [0], [1], [0, 0, 1, 1], [], []>} : vector<1x32xbf16>, vector<32x128xbf16>, vector<1x128xf32> -> vector<1x128xf32>
    %38 = arith.addf %35, %37 : vector<1x128xf32>
    %39 = vector.extract_strided_slice %38 {offsets = [0, 0], sizes = [1, 96], strides = [1, 1]} : vector<1x128xf32> to vector<1x96xf32>
    %40 = arith.negf %39 : vector<1x96xf32>
    %41 = math.exp %40 : vector<1x96xf32>
    %cst_16 = arith.constant 1.000000e+00 : f32
    %42 = vector.broadcast %cst_16 : f32 to vector<1x96xf32>
    %43 = arith.addf %42, %41 : vector<1x96xf32>
    %44 = arith.divf %42, %43 : vector<1x96xf32>
    %45 = vector.extract_strided_slice %38 {offsets = [0, 96], sizes = [1, 32], strides = [1, 1]} : vector<1x128xf32> to vector<1x32xf32>
    %46 = math.tanh %45 : vector<1x32xf32>
    %47 = vector.extract_strided_slice %44 {offsets = [0, 0], sizes = [1, 32], strides = [1, 1]} : vector<1x96xf32> to vector<1x32xf32>
    %48 = vector.extract_strided_slice %44 {offsets = [0, 32], sizes = [1, 32], strides = [1, 1]} : vector<1x96xf32> to vector<1x32xf32>
    %49 = vector.extract_strided_slice %44 {offsets = [0, 64], sizes = [1, 32], strides = [1, 1]} : vector<1x96xf32> to vector<1x32xf32>
    %50 = arith.mulf %48, %28 : vector<1x32xf32>
    %51 = arith.mulf %47, %46 : vector<1x32xf32>
    %52 = arith.addf %50, %51 : vector<1x32xf32>
    %53 = math.tanh %52 : vector<1x32xf32>
    %54 = arith.mulf %49, %53 : vector<1x32xf32>
    %c1 = arith.constant 1 : index
    %c0_17 = arith.constant 0 : index
    %c0_18 = arith.constant 0 : index
    %55 = vector.load %arg8[%c1, %c0_17, %c0_18] : memref<8x1x32xf32, #tpu.memory_space<vmem>>, vector<1x1x32xf32>
    %56 = vector.shape_cast %55 : vector<1x1x32xf32> to vector<1x32xf32>
    %57 = vector.shape_cast %54 : vector<1x32xf32> to vector<1x1x32xf32>
    tpu.vector_store %arg8[%c1, %c0_17, %c0_18], %57 {strides = array<i32>} : memref<8x1x32xf32, #tpu.memory_space<vmem>>, vector<1x1x32xf32>,
    %58 = vector.extract_strided_slice %6 {offsets = [2, 0, 0], sizes = [1, 1, 128], strides = [1, 1, 1]} : vector<8x1x128xf32> to vector<1x1x128xf32>
    %59 = vector.shape_cast %58 : vector<1x1x128xf32> to vector<1x128xf32>
    %60 = arith.truncf %54 : vector<1x32xf32> to vector<1x32xbf16>
    %cst_19 = arith.constant dense<0.000000e+00> : vector<1x128xf32>
    %61 = tpu.matmul %60, %7, %cst_19 {dimension_numbers = #tpu.dot_dimension_numbers<[1], [0], [0], [1], [0, 0, 1, 1], [], []>} : vector<1x32xbf16>, vector<32x128xbf16>, vector<1x128xf32> -> vector<1x128xf32>
    %62 = arith.addf %59, %61 : vector<1x128xf32>
    %63 = vector.extract_strided_slice %62 {offsets = [0, 0], sizes = [1, 96], strides = [1, 1]} : vector<1x128xf32> to vector<1x96xf32>
    %64 = arith.negf %63 : vector<1x96xf32>
    %65 = math.exp %64 : vector<1x96xf32>
    %cst_20 = arith.constant 1.000000e+00 : f32
    %66 = vector.broadcast %cst_20 : f32 to vector<1x96xf32>
    %67 = arith.addf %66, %65 : vector<1x96xf32>
    %68 = arith.divf %66, %67 : vector<1x96xf32>
    %69 = vector.extract_strided_slice %62 {offsets = [0, 96], sizes = [1, 32], strides = [1, 1]} : vector<1x128xf32> to vector<1x32xf32>
    %70 = math.tanh %69 : vector<1x32xf32>
    %71 = vector.extract_strided_slice %68 {offsets = [0, 0], sizes = [1, 32], strides = [1, 1]} : vector<1x96xf32> to vector<1x32xf32>
    %72 = vector.extract_strided_slice %68 {offsets = [0, 32], sizes = [1, 32], strides = [1, 1]} : vector<1x96xf32> to vector<1x32xf32>
    %73 = vector.extract_strided_slice %68 {offsets = [0, 64], sizes = [1, 32], strides = [1, 1]} : vector<1x96xf32> to vector<1x32xf32>
    %74 = arith.mulf %72, %52 : vector<1x32xf32>
    %75 = arith.mulf %71, %70 : vector<1x32xf32>
    %76 = arith.addf %74, %75 : vector<1x32xf32>
    %77 = math.tanh %76 : vector<1x32xf32>
    %78 = arith.mulf %73, %77 : vector<1x32xf32>
    %c2 = arith.constant 2 : index
    %c0_21 = arith.constant 0 : index
    %c0_22 = arith.constant 0 : index
    %79 = vector.load %arg8[%c2, %c0_21, %c0_22] : memref<8x1x32xf32, #tpu.memory_space<vmem>>, vector<1x1x32xf32>
    %80 = vector.shape_cast %79 : vector<1x1x32xf32> to vector<1x32xf32>
    %81 = vector.shape_cast %78 : vector<1x32xf32> to vector<1x1x32xf32>
    tpu.vector_store %arg8[%c2, %c0_21, %c0_22], %81 {strides = array<i32>} : memref<8x1x32xf32, #tpu.memory_space<vmem>>, vector<1x1x32xf32>,
    %82 = vector.extract_strided_slice %6 {offsets = [3, 0, 0], sizes = [1, 1, 128], strides = [1, 1, 1]} : vector<8x1x128xf32> to vector<1x1x128xf32>
    %83 = vector.shape_cast %82 : vector<1x1x128xf32> to vector<1x128xf32>
    %84 = arith.truncf %78 : vector<1x32xf32> to vector<1x32xbf16>
    %cst_23 = arith.constant dense<0.000000e+00> : vector<1x128xf32>
    %85 = tpu.matmul %84, %7, %cst_23 {dimension_numbers = #tpu.dot_dimension_numbers<[1], [0], [0], [1], [0, 0, 1, 1], [], []>} : vector<1x32xbf16>, vector<32x128xbf16>, vector<1x128xf32> -> vector<1x128xf32>
    %86 = arith.addf %83, %85 : vector<1x128xf32>
    %87 = vector.extract_strided_slice %86 {offsets = [0, 0], sizes = [1, 96], strides = [1, 1]} : vector<1x128xf32> to vector<1x96xf32>
    %88 = arith.negf %87 : vector<1x96xf32>
    %89 = math.exp %88 : vector<1x96xf32>
    %cst_24 = arith.constant 1.000000e+00 : f32
    %90 = vector.broadcast %cst_24 : f32 to vector<1x96xf32>
    %91 = arith.addf %90, %89 : vector<1x96xf32>
    %92 = arith.divf %90, %91 : vector<1x96xf32>
    %93 = vector.extract_strided_slice %86 {offsets = [0, 96], sizes = [1, 32], strides = [1, 1]} : vector<1x128xf32> to vector<1x32xf32>
    %94 = math.tanh %93 : vector<1x32xf32>
    %95 = vector.extract_strided_slice %92 {offsets = [0, 0], sizes = [1, 32], strides = [1, 1]} : vector<1x96xf32> to vector<1x32xf32>
    %96 = vector.extract_strided_slice %92 {offsets = [0, 32], sizes = [1, 32], strides = [1, 1]} : vector<1x96xf32> to vector<1x32xf32>
    %97 = vector.extract_strided_slice %92 {offsets = [0, 64], sizes = [1, 32], strides = [1, 1]} : vector<1x96xf32> to vector<1x32xf32>
    %98 = arith.mulf %96, %76 : vector<1x32xf32>
    %99 = arith.mulf %95, %94 : vector<1x32xf32>
    %100 = arith.addf %98, %99 : vector<1x32xf32>
    %101 = math.tanh %100 : vector<1x32xf32>
    %102 = arith.mulf %97, %101 : vector<1x32xf32>
    %c3 = arith.constant 3 : index
    %c0_25 = arith.constant 0 : index
    %c0_26 = arith.constant 0 : index
    %103 = vector.load %arg8[%c3, %c0_25, %c0_26] : memref<8x1x32xf32, #tpu.memory_space<vmem>>, vector<1x1x32xf32>
    %104 = vector.shape_cast %103 : vector<1x1x32xf32> to vector<1x32xf32>
    %105 = vector.shape_cast %102 : vector<1x32xf32> to vector<1x1x32xf32>
    tpu.vector_store %arg8[%c3, %c0_25, %c0_26], %105 {strides = array<i32>} : memref<8x1x32xf32, #tpu.memory_space<vmem>>, vector<1x1x32xf32>,
    %106 = vector.extract_strided_slice %6 {offsets = [4, 0, 0], sizes = [1, 1, 128], strides = [1, 1, 1]} : vector<8x1x128xf32> to vector<1x1x128xf32>
    %107 = vector.shape_cast %106 : vector<1x1x128xf32> to vector<1x128xf32>
    %108 = arith.truncf %102 : vector<1x32xf32> to vector<1x32xbf16>
    %cst_27 = arith.constant dense<0.000000e+00> : vector<1x128xf32>
    %109 = tpu.matmul %108, %7, %cst_27 {dimension_numbers = #tpu.dot_dimension_numbers<[1], [0], [0], [1], [0, 0, 1, 1], [], []>} : vector<1x32xbf16>, vector<32x128xbf16>, vector<1x128xf32> -> vector<1x128xf32>
    %110 = arith.addf %107, %109 : vector<1x128xf32>
    %111 = vector.extract_strided_slice %110 {offsets = [0, 0], sizes = [1, 96], strides = [1, 1]} : vector<1x128xf32> to vector<1x96xf32>
    %112 = arith.negf %111 : vector<1x96xf32>
    %113 = math.exp %112 : vector<1x96xf32>
    %cst_28 = arith.constant 1.000000e+00 : f32
    %114 = vector.broadcast %cst_28 : f32 to vector<1x96xf32>
    %115 = arith.addf %114, %113 : vector<1x96xf32>
    %116 = arith.divf %114, %115 : vector<1x96xf32>
    %117 = vector.extract_strided_slice %110 {offsets = [0, 96], sizes = [1, 32], strides = [1, 1]} : vector<1x128xf32> to vector<1x32xf32>
    %118 = math.tanh %117 : vector<1x32xf32>
    %119 = vector.extract_strided_slice %116 {offsets = [0, 0], sizes = [1, 32], strides = [1, 1]} : vector<1x96xf32> to vector<1x32xf32>
    %120 = vector.extract_strided_slice %116 {offsets = [0, 32], sizes = [1, 32], strides = [1, 1]} : vector<1x96xf32> to vector<1x32xf32>
    %121 = vector.extract_strided_slice %116 {offsets = [0, 64], sizes = [1, 32], strides = [1, 1]} : vector<1x96xf32> to vector<1x32xf32>
    %122 = arith.mulf %120, %100 : vector<1x32xf32>
    %123 = arith.mulf %119, %118 : vector<1x32xf32>
    %124 = arith.addf %122, %123 : vector<1x32xf32>
    %125 = math.tanh %124 : vector<1x32xf32>
    %126 = arith.mulf %121, %125 : vector<1x32xf32>
    %c4 = arith.constant 4 : index
    %c0_29 = arith.constant 0 : index
    %c0_30 = arith.constant 0 : index
    %127 = vector.load %arg8[%c4, %c0_29, %c0_30] : memref<8x1x32xf32, #tpu.memory_space<vmem>>, vector<1x1x32xf32>
    %128 = vector.shape_cast %127 : vector<1x1x32xf32> to vector<1x32xf32>
    %129 = vector.shape_cast %126 : vector<1x32xf32> to vector<1x1x32xf32>
    tpu.vector_store %arg8[%c4, %c0_29, %c0_30], %129 {strides = array<i32>} : memref<8x1x32xf32, #tpu.memory_space<vmem>>, vector<1x1x32xf32>,
    %130 = vector.extract_strided_slice %6 {offsets = [5, 0, 0], sizes = [1, 1, 128], strides = [1, 1, 1]} : vector<8x1x128xf32> to vector<1x1x128xf32>
    %131 = vector.shape_cast %130 : vector<1x1x128xf32> to vector<1x128xf32>
    %132 = arith.truncf %126 : vector<1x32xf32> to vector<1x32xbf16>
    %cst_31 = arith.constant dense<0.000000e+00> : vector<1x128xf32>
    %133 = tpu.matmul %132, %7, %cst_31 {dimension_numbers = #tpu.dot_dimension_numbers<[1], [0], [0], [1], [0, 0, 1, 1], [], []>} : vector<1x32xbf16>, vector<32x128xbf16>, vector<1x128xf32> -> vector<1x128xf32>
    %134 = arith.addf %131, %133 : vector<1x128xf32>
    %135 = vector.extract_strided_slice %134 {offsets = [0, 0], sizes = [1, 96], strides = [1, 1]} : vector<1x128xf32> to vector<1x96xf32>
    %136 = arith.negf %135 : vector<1x96xf32>
    %137 = math.exp %136 : vector<1x96xf32>
    %cst_32 = arith.constant 1.000000e+00 : f32
    %138 = vector.broadcast %cst_32 : f32 to vector<1x96xf32>
    %139 = arith.addf %138, %137 : vector<1x96xf32>
    %140 = arith.divf %138, %139 : vector<1x96xf32>
    %141 = vector.extract_strided_slice %134 {offsets = [0, 96], sizes = [1, 32], strides = [1, 1]} : vector<1x128xf32> to vector<1x32xf32>
    %142 = math.tanh %141 : vector<1x32xf32>
    %143 = vector.extract_strided_slice %140 {offsets = [0, 0], sizes = [1, 32], strides = [1, 1]} : vector<1x96xf32> to vector<1x32xf32>
    %144 = vector.extract_strided_slice %140 {offsets = [0, 32], sizes = [1, 32], strides = [1, 1]} : vector<1x96xf32> to vector<1x32xf32>
    %145 = vector.extract_strided_slice %140 {offsets = [0, 64], sizes = [1, 32], strides = [1, 1]} : vector<1x96xf32> to vector<1x32xf32>
    %146 = arith.mulf %144, %124 : vector<1x32xf32>
    %147 = arith.mulf %143, %142 : vector<1x32xf32>
    %148 = arith.addf %146, %147 : vector<1x32xf32>
    %149 = math.tanh %148 : vector<1x32xf32>
    %150 = arith.mulf %145, %149 : vector<1x32xf32>
    %c5 = arith.constant 5 : index
    %c0_33 = arith.constant 0 : index
    %c0_34 = arith.constant 0 : index
    %151 = vector.load %arg8[%c5, %c0_33, %c0_34] : memref<8x1x32xf32, #tpu.memory_space<vmem>>, vector<1x1x32xf32>
    %152 = vector.shape_cast %151 : vector<1x1x32xf32> to vector<1x32xf32>
    %153 = vector.shape_cast %150 : vector<1x32xf32> to vector<1x1x32xf32>
    tpu.vector_store %arg8[%c5, %c0_33, %c0_34], %153 {strides = array<i32>} : memref<8x1x32xf32, #tpu.memory_space<vmem>>, vector<1x1x32xf32>,
    %154 = vector.extract_strided_slice %6 {offsets = [6, 0, 0], sizes = [1, 1, 128], strides = [1, 1, 1]} : vector<8x1x128xf32> to vector<1x1x128xf32>
    %155 = vector.shape_cast %154 : vector<1x1x128xf32> to vector<1x128xf32>
    %156 = arith.truncf %150 : vector<1x32xf32> to vector<1x32xbf16>
    %cst_35 = arith.constant dense<0.000000e+00> : vector<1x128xf32>
    %157 = tpu.matmul %156, %7, %cst_35 {dimension_numbers = #tpu.dot_dimension_numbers<[1], [0], [0], [1], [0, 0, 1, 1], [], []>} : vector<1x32xbf16>, vector<32x128xbf16>, vector<1x128xf32> -> vector<1x128xf32>
    %158 = arith.addf %155, %157 : vector<1x128xf32>
    %159 = vector.extract_strided_slice %158 {offsets = [0, 0], sizes = [1, 96], strides = [1, 1]} : vector<1x128xf32> to vector<1x96xf32>
    %160 = arith.negf %159 : vector<1x96xf32>
    %161 = math.exp %160 : vector<1x96xf32>
    %cst_36 = arith.constant 1.000000e+00 : f32
    %162 = vector.broadcast %cst_36 : f32 to vector<1x96xf32>
    %163 = arith.addf %162, %161 : vector<1x96xf32>
    %164 = arith.divf %162, %163 : vector<1x96xf32>
    %165 = vector.extract_strided_slice %158 {offsets = [0, 96], sizes = [1, 32], strides = [1, 1]} : vector<1x128xf32> to vector<1x32xf32>
    %166 = math.tanh %165 : vector<1x32xf32>
    %167 = vector.extract_strided_slice %164 {offsets = [0, 0], sizes = [1, 32], strides = [1, 1]} : vector<1x96xf32> to vector<1x32xf32>
    %168 = vector.extract_strided_slice %164 {offsets = [0, 32], sizes = [1, 32], strides = [1, 1]} : vector<1x96xf32> to vector<1x32xf32>
    %169 = vector.extract_strided_slice %164 {offsets = [0, 64], sizes = [1, 32], strides = [1, 1]} : vector<1x96xf32> to vector<1x32xf32>
    %170 = arith.mulf %168, %148 : vector<1x32xf32>
    %171 = arith.mulf %167, %166 : vector<1x32xf32>
    %172 = arith.addf %170, %171 : vector<1x32xf32>
    %173 = math.tanh %172 : vector<1x32xf32>
    %174 = arith.mulf %169, %173 : vector<1x32xf32>
    %c6 = arith.constant 6 : index
    %c0_37 = arith.constant 0 : index
    %c0_38 = arith.constant 0 : index
    %175 = vector.load %arg8[%c6, %c0_37, %c0_38] : memref<8x1x32xf32, #tpu.memory_space<vmem>>, vector<1x1x32xf32>
    %176 = vector.shape_cast %175 : vector<1x1x32xf32> to vector<1x32xf32>
    %177 = vector.shape_cast %174 : vector<1x32xf32> to vector<1x1x32xf32>
    tpu.vector_store %arg8[%c6, %c0_37, %c0_38], %177 {strides = array<i32>} : memref<8x1x32xf32, #tpu.memory_space<vmem>>, vector<1x1x32xf32>,
    %178 = vector.extract_strided_slice %6 {offsets = [7, 0, 0], sizes = [1, 1, 128], strides = [1, 1, 1]} : vector<8x1x128xf32> to vector<1x1x128xf32>
    %179 = vector.shape_cast %178 : vector<1x1x128xf32> to vector<1x128xf32>
    %180 = arith.truncf %174 : vector<1x32xf32> to vector<1x32xbf16>
    %cst_39 = arith.constant dense<0.000000e+00> : vector<1x128xf32>
    %181 = tpu.matmul %180, %7, %cst_39 {dimension_numbers = #tpu.dot_dimension_numbers<[1], [0], [0], [1], [0, 0, 1, 1], [], []>} : vector<1x32xbf16>, vector<32x128xbf16>, vector<1x128xf32> -> vector<1x128xf32>
    %182 = arith.addf %179, %181 : vector<1x128xf32>
    %183 = vector.extract_strided_slice %182 {offsets = [0, 0], sizes = [1, 96], strides = [1, 1]} : vector<1x128xf32> to vector<1x96xf32>
    %184 = arith.negf %183 : vector<1x96xf32>
    %185 = math.exp %184 : vector<1x96xf32>
    %cst_40 = arith.constant 1.000000e+00 : f32
    %186 = vector.broadcast %cst_40 : f32 to vector<1x96xf32>
    %187 = arith.addf %186, %185 : vector<1x96xf32>
    %188 = arith.divf %186, %187 : vector<1x96xf32>
    %189 = vector.extract_strided_slice %182 {offsets = [0, 96], sizes = [1, 32], strides = [1, 1]} : vector<1x128xf32> to vector<1x32xf32>
    %190 = math.tanh %189 : vector<1x32xf32>
    %191 = vector.extract_strided_slice %188 {offsets = [0, 0], sizes = [1, 32], strides = [1, 1]} : vector<1x96xf32> to vector<1x32xf32>
    %192 = vector.extract_strided_slice %188 {offsets = [0, 32], sizes = [1, 32], strides = [1, 1]} : vector<1x96xf32> to vector<1x32xf32>
    %193 = vector.extract_strided_slice %188 {offsets = [0, 64], sizes = [1, 32], strides = [1, 1]} : vector<1x96xf32> to vector<1x32xf32>
    %194 = arith.mulf %192, %172 : vector<1x32xf32>
    %195 = arith.mulf %191, %190 : vector<1x32xf32>
    %196 = arith.addf %194, %195 : vector<1x32xf32>
    %197 = math.tanh %196 : vector<1x32xf32>
    %198 = arith.mulf %193, %197 : vector<1x32xf32>
    %c7 = arith.constant 7 : index
    %c0_41 = arith.constant 0 : index
    %c0_42 = arith.constant 0 : index
    %199 = vector.load %arg8[%c7, %c0_41, %c0_42] : memref<8x1x32xf32, #tpu.memory_space<vmem>>, vector<1x1x32xf32>
    %200 = vector.shape_cast %199 : vector<1x1x32xf32> to vector<1x32xf32>
    %201 = vector.shape_cast %198 : vector<1x32xf32> to vector<1x1x32xf32>
    tpu.vector_store %arg8[%c7, %c0_41, %c0_42], %201 {strides = array<i32>} : memref<8x1x32xf32, #tpu.memory_space<vmem>>, vector<1x1x32xf32>,
    %c0_43 = arith.constant 0 : index
    %c0_44 = arith.constant 0 : index
    %c0_45 = arith.constant 0 : index
    %202 = vector.load %arg8[%c0_43, %c0_44, %c0_45] : memref<8x1x32xf32, #tpu.memory_space<vmem>>, vector<8x1x32xf32>
    %c0_46 = arith.constant 0 : index
    %c0_47 = arith.constant 0 : index
    %203 = vector.load %arg5[%c0_46, %c0_47] : memref<32x128xf32, #tpu.memory_space<vmem>>, vector<32x128xf32>
    %cst_48 = arith.constant dense<0.000000e+00> : vector<8x1x128xf32>
    %204 = tpu.matmul %202, %203, %cst_48 {dimension_numbers = #tpu.dot_dimension_numbers<[2], [0], [0, 1], [1], [0, 0, 0, 1, 1, 1], [], []>} : vector<8x1x32xf32>, vector<32x128xf32>, vector<8x1x128xf32> -> vector<8x1x128xf32>
    %c0_49 = arith.constant 0 : index
    %c0_50 = arith.constant 0 : index
    %205 = vector.load %arg6[%c0_49, %c0_50] : memref<1x128xf32, #tpu.memory_space<vmem>>, vector<1x128xf32>
    %206 = vector.shape_cast %205 : vector<1x128xf32> to vector<1x1x128xf32>
    %207 = vector.broadcast %206 : vector<1x1x128xf32> to vector<8x1x128xf32>
    %208 = arith.addf %204, %207 : vector<8x1x128xf32>
    %cst_51 = arith.constant dense<0xFF800000> : vector<8x1xf32>
    %209 = vector.multi_reduction <maximumf>, %208, %cst_51 [2] : vector<8x1x128xf32> to vector<8x1xf32>
    %210 = vector.shape_cast %209 : vector<8x1xf32> to vector<8x1x1xf32>
    %211 = vector.broadcast %210 : vector<8x1x1xf32> to vector<8x1x128xf32>
    %212 = arith.subf %208, %211 : vector<8x1x128xf32>
    %213 = math.exp %212 : vector<8x1x128xf32>
    %cst_52 = arith.constant dense<0.000000e+00> : vector<8x1xf32>
    %214 = vector.multi_reduction <add>, %213, %cst_52 [2] : vector<8x1x128xf32> to vector<8x1xf32>
    %215 = vector.shape_cast %214 : vector<8x1xf32> to vector<8x1x1xf32>
    %216 = math.log %215 : vector<8x1x1xf32>
    %217 = vector.broadcast %216 : vector<8x1x1xf32> to vector<8x1x128xf32>
    %218 = arith.subf %212, %217 : vector<8x1x128xf32>
    %c0_53 = arith.constant 0 : index
    %c0_54 = arith.constant 0 : index
    %c0_55 = arith.constant 0 : index
    %219 = vector.load %arg7[%c0_53, %c0_54, %c0_55] : memref<8x1x128xf32, #tpu.memory_space<vmem>>, vector<8x1x128xf32>
    tpu.vector_store %arg7[%c0_53, %c0_54, %c0_55], %218 {strides = array<i32>} : memref<8x1x128xf32, #tpu.memory_space<vmem>>, vector<8x1x128xf32>,
    return
  }
  func.func @transform_0(%arg0: i32) -> (i32, i32, i32) {
    %c0_i32 = arith.constant 0 : i32
    %c0_i32_0 = arith.constant 0 : i32
    %c0_i32_1 = arith.constant 0 : i32
    return %c0_i32, %arg0, %c0_i32_0 : i32, i32, i32
  }
  func.func @transform_1(%arg0: i32) -> (i32, i32) {
    %c0_i32 = arith.constant 0 : i32
    %c0_i32_0 = arith.constant 0 : i32
    %c0_i32_1 = arith.constant 0 : i32
    return %c0_i32, %c0_i32_0 : i32, i32
  }
  func.func @transform_2(%arg0: i32) -> (i32, i32) {
    %c0_i32 = arith.constant 0 : i32
    %c0_i32_0 = arith.constant 0 : i32
    %c0_i32_1 = arith.constant 0 : i32
    return %c0_i32, %c0_i32_0 : i32, i32
  }
  func.func @transform_3(%arg0: i32) -> (i32, i32) {
    %c0_i32 = arith.constant 0 : i32
    %c0_i32_0 = arith.constant 0 : i32
    %c0_i32_1 = arith.constant 0 : i32
    return %c0_i32, %c0_i32_0 : i32, i32
  }
  func.func @transform_4(%arg0: i32) -> (i32, i32) {
    %c0_i32 = arith.constant 0 : i32
    %c0_i32_0 = arith.constant 0 : i32
    %c0_i32_1 = arith.constant 0 : i32
    return %c0_i32, %c0_i32_0 : i32, i32
  }
  func.func @transform_5(%arg0: i32) -> (i32, i32) {
    %c0_i32 = arith.constant 0 : i32
    %c0_i32_0 = arith.constant 0 : i32
    %c0_i32_1 = arith.constant 0 : i32
    return %c0_i32, %c0_i32_0 : i32, i32
  }
  func.func @transform_6(%arg0: i32) -> (i32, i32, i32) {
    %c0_i32 = arith.constant 0 : i32
    %c0_i32_0 = arith.constant 0 : i32
    %c0_i32_1 = arith.constant 0 : i32
    return %c0_i32, %arg0, %c0_i32_0 : i32, i32, i32
  }
}

</mosaic_0001>

<llo_original>
// kernel: lstm_tagger_forward_batched.1
$region0: #{lstm_tagger_forward_batched.1}
  #allocation0 [shape = 'u32[]', space=smem, size = 0x4, offset = 0x4, fixed_abs, tag = 'smem constant byte address 0x4 - core index']
  #allocation1 [shape = 'u32[72,128]{1,0:T(1,128)}', space=vmem, size = 0x9000, scoped, tag = 'internal scratch']
  #allocation2 [shape = 'f32[8,1,32]{2,1,0:T(1,128)}', space=vmem, size = 0x1000, scoped, tag = 'scratch operand']
  %s0 = inlined_call_operand.hbm [shape: f32[8,1,32], index: 0, kind: input, shape index: {}]
  %s1 = inlined_call_operand.hbm [shape: f32[32,128], index: 1, kind: input, shape index: {}]
  %s2 = inlined_call_operand.hbm [shape: bf16[32,128], index: 2, kind: input, shape index: {}]
  %s3 = inlined_call_operand.vmem [shape: f32[1,128], index: 3, kind: input, shape index: {}]
  %s4 = inlined_call_operand.hbm [shape: f32[32,128], index: 4, kind: input, shape index: {}]
  %s5 = inlined_call_operand.vmem [shape: f32[1,128], index: 5, kind: input, shape index: {}]
  %s6 = inlined_call_operand.hbm [shape: f32[8,1,128], index: 6, kind: output, shape index: {}]
  %s7 = sld [smem:[#allocation0]]
  $region50: #{lstm_tagger_forward_batched.1} parent=0
    _
  %s9 = ssub.s32 1, %s7
  %s10 = scalar_select 0, %s9, %s7
  $region1: #{lstm_tagger_forward_batched.1} parent=0
    #allocation3 [shape = 'u8[4096]{0}', space=vmem, size = 0x1000, scoped, tag = 'input window, operand 0, single buffered']
    #allocation4 [shape = 's32[1]{0}', space=sflag, size = 0x4, scoped, tag = 'scoped memory for lstm_tagger_forward_batched.1']
    #allocation5 [shape = 's32[1]{0}', space=sflag, size = 0x4, scoped, tag = 'scoped memory for lstm_tagger_forward_batched.1']
    #allocation6 [shape = 'u8[16384]{0}', space=vmem, size = 0x4000, scoped, tag = 'input window, operand 1, single buffered']
    #allocation7 [shape = 's32[1]{0}', space=sflag, size = 0x4, scoped, tag = 'scoped memory for lstm_tagger_forward_batched.1']
    #allocation8 [shape = 'u8[8192]{0}', space=vmem, size = 0x2000, scoped, tag = 'input window, operand 2, single buffered']
    #allocation9 [shape = 'u8[16384]{0}', space=vmem, size = 0x4000, scoped, tag = 'input window, operand 4, single buffered']
    #allocation10 [shape = 's32[1]{0}', space=sflag, size = 0x4, scoped, tag = 'scoped memory for lstm_tagger_forward_batched.1']
    #allocation11 [shape = 'u8[4096]{0}', space=vmem, size = 0x1000, scoped, tag = 'output window, operand 0, single buffered']
    %11 = vsyncpa [#allocation4], 0
    %12 = vsyncpa [#allocation7], 0
    %13 = vsyncpa [#allocation10], 0
    %14 = vsyncpa [#allocation5], 0
    // Predicated region
    $region2: #{lstm_tagger_forward_batched.1} parent=1 // pred_check
      _
    $region3: #{lstm_tagger_forward_batched.1} parent=1 // pred_check_branch
      %16 = sbr.rel (0) target = $region5
    $region4: #{lstm_tagger_forward_batched.1} parent=1 // pred_region
      %18 = vsyncadd [#allocation4], 0
      %s19 = sshll.u32 %s0, 4
      %s20 = int_to_ptr.hbm [resolvable:$true] %s19
      %s21 = sshll.u32 [#allocation3], 4
      %s22 = int_to_ptr.vmem [resolvable:$true] %s21
      %27 = dma.hbm_to_vmem [thread:$0]  %s20, 128, %s22, [#allocation4], 16, 16, 1
    $region5: #{lstm_tagger_forward_batched.1} parent=1 // pred_fallthru
      _
    // Predicated region
    $region6: #{lstm_tagger_forward_batched.1} parent=1 // pred_check
      _
    $region7: #{lstm_tagger_forward_batched.1} parent=1 // pred_check_branch
      %29 = sbr.rel (0) target = $region9
    $region8: #{lstm_tagger_forward_batched.1} parent=1 // pred_region
      %31 = vsyncadd [#allocation7], 0
      %s32 = sshll.u32 %s1, 4
      %s33 = int_to_ptr.hbm [resolvable:$true] %s32
      %s34 = sshll.u32 [#allocation6], 4
      %s35 = int_to_ptr.vmem [resolvable:$true] %s34
      %40 = dma.hbm_to_vmem [thread:$0]  %s33, 512, %s35, [#allocation7], 128, 128, 8
    $region9: #{lstm_tagger_forward_batched.1} parent=1 // pred_fallthru
      _
    // Predicated region
    $region10: #{lstm_tagger_forward_batched.1} parent=1 // pred_check
      _
    $region11: #{lstm_tagger_forward_batched.1} parent=1 // pred_check_branch
      %42 = sbr.rel (0) target = $region13
    $region12: #{lstm_tagger_forward_batched.1} parent=1 // pred_region
      %44 = vsyncadd [#allocation7], 0
      %s45 = sshll.u32 %s2, 4
      %s46 = int_to_ptr.hbm [resolvable:$true] %s45
      %s47 = sshll.u32 [#allocation8], 4
      %s48 = int_to_ptr.vmem [resolvable:$true] %s47
      %53 = dma.hbm_to_vmem [thread:$0]  %s46, 256, %s48, [#allocation7], 64, 64, 4
    $region13: #{lstm_tagger_forward_batched.1} parent=1 // pred_fallthru
      _
    // Predicated region
    $region14: #{lstm_tagger_forward_batched.1} parent=1 // pred_check
      _
    $region15: #{lstm_tagger_forward_batched.1} parent=1 // pred_check_branch
      %55 = sbr.rel (0) target = $region17
    $region16: #{lstm_tagger_forward_batched.1} parent=1 // pred_region
      _
    $region17: #{lstm_tagger_forward_batched.1} parent=1 // pred_fallthru
      _
    // Predicated region
    $region18: #{lstm_tagger_forward_batched.1} parent=1 // pred_check
      _
    $region19: #{lstm_tagger_forward_batched.1} parent=1 // pred_check_branch
      %57 = sbr.rel (0) target = $region21
    $region20: #{lstm_tagger_forward_batched.1} parent=1 // pred_region
      %59 = vsyncadd [#allocation10], 0
      %s60 = sshll.u32 %s4, 4
      %s61 = int_to_ptr.hbm [resolvable:$true] %s60
      %s62 = sshll.u32 [#allocation9], 4
      %s63 = int_to_ptr.vmem [resolvable:$true] %s62
      %68 = dma.hbm_to_vmem [thread:$0]  %s61, 512, %s63, [#allocation10], 128, 128, 8
    $region21: #{lstm_tagger_forward_batched.1} parent=1 // pred_fallthru
      _
    // Predicated region
    $region22: #{lstm_tagger_forward_batched.1} parent=1 // pred_check
      _
    $region23: #{lstm_tagger_forward_batched.1} parent=1 // pred_check_branch
      %70 = sbr.rel (0) target = $region25
    $region24: #{lstm_tagger_forward_batched.1} parent=1 // pred_region
      _
    $region25: #{lstm_tagger_forward_batched.1} parent=1 // pred_fallthru
      _
    // Predicated region
    $region26: #{lstm_tagger_forward_batched.1} parent=1 // pred_check
      _
    $region27: #{lstm_tagger_forward_batched.1} parent=1 // pred_check_branch
      %72 = sbr.rel (0) target = $region29
    $region28: #{lstm_tagger_forward_batched.1} parent=1 // pred_region
      %74 = dma.done [#allocation4], 128
    $region29: #{lstm_tagger_forward_batched.1} parent=1 // pred_fallthru
      _
    // Predicated region
    $region30: #{lstm_tagger_forward_batched.1} parent=1 // pred_check
      _
    $region31: #{lstm_tagger_forward_batched.1} parent=1 // pred_check_branch
      %76 = sbr.rel (0) target = $region33
    $region32: #{lstm_tagger_forward_batched.1} parent=1 // pred_region
      %78 = dma.done [#allocation7], 512
    $region33: #{lstm_tagger_forward_batched.1} parent=1 // pred_fallthru
      _
    // Predicated region
    $region34: #{lstm_tagger_forward_batched.1} parent=1 // pred_check
      _
    $region35: #{lstm_tagger_forward_batched.1} parent=1 // pred_check_branch
      %80 = sbr.rel (0) target = $region37
    $region36: #{lstm_tagger_forward_batched.1} parent=1 // pred_region
      %82 = dma.done [#allocation7], 256
    $region37: #{lstm_tagger_forward_batched.1} parent=1 // pred_fallthru
      _
    // Predicated region
    $region38: #{lstm_tagger_forward_batched.1} parent=1 // pred_check
      _
    $region39: #{lstm_tagger_forward_batched.1} parent=1 // pred_check_branch
      %84 = sbr.rel (0) target = $region41
    $region40: #{lstm_tagger_forward_batched.1} parent=1 // pred_region
      %86 = dma.done [#allocation10], 512
    $region41: #{lstm_tagger_forward_batched.1} parent=1 // pred_fallthru
      _
    %v88 = vld [vmem:[#allocation3] sm:$0x1]
    %v89 = vld [vmem:[#allocation3 + $0x1] sm:$0x1]
    %v90 = vld [vmem:[#allocation3 + $0x2] sm:$0x1]
    %v91 = vld [vmem:[#allocation3 + $0x3] sm:$0x1]
    %v92 = vld [vmem:[#allocation3 + $0x4] sm:$0x1]
    %v93 = vld [vmem:[#allocation3 + $0x5] sm:$0x1]
    %v94 = vld [vmem:[#allocation3 + $0x6] sm:$0x1]
    %v95 = vld [vmem:[#allocation3 + $0x7] sm:$0x1]
    %v96 = vld [vmem:[#allocation6] sm:$0xff]
    %v97 = vld [vmem:[#allocation6 + $0x8] sm:$0xff]
    %v98 = vld [vmem:[#allocation6 + $0x10] sm:$0xff]
    %v99 = vld [vmem:[#allocation6 + $0x18] sm:$0xff]
    %v100 = vld [vmem:[%s3] sm:$0x1]
    %109 = vst [vmem:[#allocation1] ss:$9 sm:$0xff] %v88
    %s110 = scalar_lea.vmem [#allocation1], 1
    %111 = vst [vmem:[%s110] ss:$9 sm:$0xff] %v89
    %s112 = scalar_lea.vmem [#allocation1], 2
    %113 = vst [vmem:[%s112] ss:$9 sm:$0xff] %v90
    %s114 = scalar_lea.vmem [#allocation1], 3
    %115 = vst [vmem:[%s114] ss:$9 sm:$0xff] %v91
    %s116 = scalar_lea.vmem [#allocation1], 4
    %117 = vst [vmem:[%s116] ss:$9 sm:$0xff] %v92
    %s118 = scalar_lea.vmem [#allocation1], 5
    %119 = vst [vmem:[%s118] ss:$9 sm:$0xff] %v93
    %s120 = scalar_lea.vmem [#allocation1], 6
    %121 = vst [vmem:[%s120] ss:$9 sm:$0xff] %v94
    %s122 = scalar_lea.vmem [#allocation1], 7
    %123 = vst [vmem:[%s122] ss:$9 sm:$0xff] %v95
    %v124 = vld [vmem:[#allocation1] sm:$0xff]
    %126 = vst [vmem:[#allocation1] ss:$9 sm:$0xff] %v100
    %s127 = scalar_lea.vmem [#allocation1], 1
    %128 = vst [vmem:[%s127] ss:$9 sm:$0xff] %v100
    %s129 = scalar_lea.vmem [#allocation1], 2
    %130 = vst [vmem:[%s129] ss:$9 sm:$0xff] %v100
    %s131 = scalar_lea.vmem [#allocation1], 3
    %132 = vst [vmem:[%s131] ss:$9 sm:$0xff] %v100
    %s133 = scalar_lea.vmem [#allocation1], 4
    %134 = vst [vmem:[%s133] ss:$9 sm:$0xff] %v100
    %s135 = scalar_lea.vmem [#allocation1], 5
    %136 = vst [vmem:[%s135] ss:$9 sm:$0xff] %v100
    %s137 = scalar_lea.vmem [#allocation1], 6
    %138 = vst [vmem:[%s137] ss:$9 sm:$0xff] %v100
    %s139 = scalar_lea.vmem [#allocation1], 7
    %140 = vst [vmem:[%s139] ss:$9 sm:$0xff] %v100
    %v141 = vld [vmem:[#allocation1] sm:$0xff]
    %vm143 = vcmask 261120
    %v144 = vsel %vm143, %v124, 0
    %146 = vmatpush.msra.mxu0 0.0
    %147 = vmatpush.msra.mxu0 0.0
    %148 = vmatpush.msra.mxu0 0.0
    %149 = vmatpush.msra.mxu0 0.0
    %150 = vmatpush.msra.mxu0 0.0
    %151 = vmatpush.msra.mxu0 0.0
    %152 = vmatpush.msra.mxu0 0.0
    %153 = vmatpush.msra.mxu0 0.0
    %154 = vmatpush.msra.mxu0 0.0
    %155 = vmatpush.msra.mxu0 0.0
    %156 = vmatpush.msra.mxu0 0.0
    %157 = vmatpush.msra.mxu0 0.0
    %158 = vmatpush.msra.mxu0 %v99
    %159 = vmatpush.msra.mxu0 %v98
    %160 = vmatpush.msra.mxu0 %v97
    %161 = vmatpush.msra.mxu0 %v96
    %162 = vmatmul.f32.gmra.mxu0 %v144
    %v163 = vpop.f32.mrf.mxu0
    %v164 = vadd.f32 %v141, %v163
    %165 = vdwg.mxu0
    %v167 = vrot.slane %v164, 1
    %v168 = vrot.slane %v164, 2
    %v169 = vrot.slane %v164, 3
    %v170 = vrot.slane %v164, 4
    %v171 = vrot.slane %v164, 5
    %v172 = vrot.slane %v164, 6
    %v173 = vrot.slane %v164, 7
    %v181 = vld [vmem:[#allocation8] sm:$0xf]
    %v182 = vld [vmem:[#allocation8 + $0x4] sm:$0xf]
    %v183 = vld [vmem:[#allocation8 + $0x8] sm:$0xf]
    %v184 = vld [vmem:[#allocation8 + $0xc] sm:$0xf]
    %v189 = vunpack.c.l.b16 %v181
    %v190 = vunpack.c.l.b16 %v182
    %v191 = vunpack.c.l.b16 %v183
    %v192 = vunpack.c.l.b16 %v184
    %v193 = vpack.c.b16 %v190, %v189
    %v194 = vpack.c.b16 %v192, %v191
    %v198 = vsel %vm143, 0, 0
    %200 = vmatpush.bf16.msra.mxu0 0
    %201 = vmatpush.bf16.msra.mxu0 0
    %202 = vmatpush.bf16.msra.mxu0 0
    %203 = vmatpush.bf16.msra.mxu0 0
    %204 = vmatpush.bf16.msra.mxu0 0
    %205 = vmatpush.bf16.msra.mxu0 0
    %206 = vmatpush.bf16.msra.mxu0 %v194
    %207 = vmatpush.bf16.msra.mxu0 %v193
    %208 = vmatmul.bf16.gmra.mxu0 %v198
    %v209 = vpop.f32.mrf.mxu0
    %v210 = vadd.f32 0.0, %v209
    %v211 = vpop.f32.mrf.mxu0
    %212 = vdwg.mxu0
    %v213 = vadd.f32 %v164, %v210
    %v214 = vxor.u32 %v213, 2147483648
    %v215 = vmul.f32 %v214, 1.442695
    %v216 = vpow.pop %v215
    %v217 = vadd.f32 %v216, 1.0
    %v218 = vrcp.pop %v217
    %v219 = vmul.f32 %v217, %v218
    %v220 = vsub.f32 1.0, %v219
    %v221 = vmul.f32 %v218, %v220
    %v222 = vadd.f32 %v218, %v221
    %vm223 = vweird.f32 %v217
    %vm224 = vweird.f32 %v218
    %vm225 = vmor %vm223, %vm224
    %v226 = vsel %vm225, %v218, %v222
    %v227 = vand.u32 2147483647, %v217
    %vm228 = vcmp.eq.f32.partialorder %v227, 8.507059e+37
    %v229 = vand.u32 %v217, 2147483648
    %v230 = vor.u32 1.1754944e-38, %v229
    %v231 = vsel %vm228, %v230, %v226
    %v232 = vmul.f32 1.0, %v231
    %v233 = vtanh.pop %v213
    %v234 = vmul.f32 %v232, 0.0
    %236 = vrot.lane.b32.xlu0 %v233, 32
    %v237 = vpop.permute.xlu0 %236
    %v239 = vmul.f32 %v232, %v237
    %241 = vrot.lane.b32.xlu0 %v239, 32
    %v242 = vpop.permute.xlu0 %241
    %v244 = vadd.f32 %v234, %v242
    %v245 = vtanh.pop %v244
    %247 = vrot.lane.b32.xlu0 %v245, 32
    %v248 = vpop.permute.xlu0 %247
    %v250 = vmul.f32 %v232, %v248
    %v252 = vperm.slane %v250, 0
    %253 = vrot.lane.b32.xlu0 %v252, 64
    %v254 = vpop.permute.xlu0 %253
    %vm256 = vcmask 253952
    %257 = vst.msk [vmem:[#allocation2] sm:$0x1] %vm256, %v254
    %v258 = vpack.c.bf16 %v250, %v250
    %260 = vrot.lane.b32.xlu0 %v258, 64
    %v261 = vpop.permute.xlu0 %260
    %v263 = vsel %vm143, %v261, 0
    %265 = vmatpush.bf16.msra.mxu0 0
    %266 = vmatpush.bf16.msra.mxu0 0
    %267 = vmatpush.bf16.msra.mxu0 0
    %268 = vmatpush.bf16.msra.mxu0 0
    %269 = vmatpush.bf16.msra.mxu0 0
    %270 = vmatpush.bf16.msra.mxu0 0
    %271 = vmatpush.bf16.msra.mxu0 %v194
    %272 = vmatpush.bf16.msra.mxu0 %v193
    %273 = vmatmul.bf16.gmra.mxu0 %v263
    %v274 = vpop.f32.mrf.mxu0
    %v275 = vadd.f32 0.0, %v274
    %v276 = vpop.f32.mrf.mxu0
    %277 = vdwg.mxu0
    %v278 = vadd.f32 %v167, %v275
    %v279 = vxor.u32 %v278, 2147483648
    %v280 = vmul.f32 %v279, 1.442695
    %v281 = vpow.pop %v280
    %v282 = vadd.f32 %v281, 1.0
    %v283 = vrcp.pop %v282
    %v284 = vmul.f32 %v282, %v283
    %v285 = vsub.f32 1.0, %v284
    %v286 = vmul.f32 %v283, %v285
    %v287 = vadd.f32 %v283, %v286
    %vm288 = vweird.f32 %v282
    %vm289 = vweird.f32 %v283
    %vm290 = vmor %vm288, %vm289
    %v291 = vsel %vm290, %v283, %v287
    %v292 = vand.u32 2147483647, %v282
    %vm293 = vcmp.eq.f32.partialorder %v292, 8.507059e+37
    %v294 = vand.u32 %v282, 2147483648
    %v295 = vor.u32 1.1754944e-38, %v294
    %v296 = vsel %vm293, %v295, %v291
    %v297 = vmul.f32 1.0, %v296
    %v298 = vtanh.pop %v278
    %v299 = vmul.f32 %v297, %v244
    %301 = vrot.lane.b32.xlu0 %v298, 32
    %v302 = vpop.permute.xlu0 %301
    %v304 = vmul.f32 %v297, %v302
    %306 = vrot.lane.b32.xlu0 %v304, 32
    %v307 = vpop.permute.xlu0 %306
    %v309 = vadd.f32 %v299, %v307
    %v310 = vtanh.pop %v309
    %312 = vrot.lane.b32.xlu0 %v310, 32
    %v313 = vpop.permute.xlu0 %312
    %v315 = vmul.f32 %v297, %v313
    %v317 = vperm.slane %v315, 0
    %318 = vrot.lane.b32.xlu0 %v317, 64
    %v319 = vpop.permute.xlu0 %318
    %s321 = scalar_lea.vmem [#allocation2], 1
    %322 = vst.msk [vmem:[%s321] sm:$0x1] %vm256, %v319
    %v323 = vpack.c.bf16 %v315, %v315
    %325 = vrot.lane.b32.xlu0 %v323, 64
    %v326 = vpop.permute.xlu0 %325
    %v328 = vsel %vm143, %v326, 0
    %330 = vmatpush.bf16.msra.mxu0 0
    %331 = vmatpush.bf16.msra.mxu0 0
    %332 = vmatpush.bf16.msra.mxu0 0
    %333 = vmatpush.bf16.msra.mxu0 0
    %334 = vmatpush.bf16.msra.mxu0 0
    %335 = vmatpush.bf16.msra.mxu0 0
    %336 = vmatpush.bf16.msra.mxu0 %v194
    %337 = vmatpush.bf16.msra.mxu0 %v193
    %338 = vmatmul.bf16.gmra.mxu0 %v328
    %v339 = vpop.f32.mrf.mxu0
    %v340 = vadd.f32 0.0, %v339
    %v341 = vpop.f32.mrf.mxu0
    %342 = vdwg.mxu0
    %v343 = vadd.f32 %v168, %v340
    %v344 = vxor.u32 %v343, 2147483648
    %v345 = vmul.f32 %v344, 1.442695
    %v346 = vpow.pop %v345
    %v347 = vadd.f32 %v346, 1.0
    %v348 = vrcp.pop %v347
    %v349 = vmul.f32 %v347, %v348
    %v350 = vsub.f32 1.0, %v349
    %v351 = vmul.f32 %v348, %v350
    %v352 = vadd.f32 %v348, %v351
    %vm353 = vweird.f32 %v347
    %vm354 = vweird.f32 %v348
    %vm355 = vmor %vm353, %vm354
    %v356 = vsel %vm355, %v348, %v352
    %v357 = vand.u32 2147483647, %v347
    %vm358 = vcmp.eq.f32.partialorder %v357, 8.507059e+37
    %v359 = vand.u32 %v347, 2147483648
    %v360 = vor.u32 1.1754944e-38, %v359
    %v361 = vsel %vm358, %v360, %v356
    %v362 = vmul.f32 1.0, %v361
    %v363 = vtanh.pop %v343
    %v364 = vmul.f32 %v362, %v309
    %366 = vrot.lane.b32.xlu0 %v363, 32
    %v367 = vpop.permute.xlu0 %366
    %v369 = vmul.f32 %v362, %v367
    %371 = vrot.lane.b32.xlu0 %v369, 32
    %v372 = vpop.permute.xlu0 %371
    %v374 = vadd.f32 %v364, %v372
    %v375 = vtanh.pop %v374
    %377 = vrot.lane.b32.xlu0 %v375, 32
    %v378 = vpop.permute.xlu0 %377
    %v380 = vmul.f32 %v362, %v378
    %v382 = vperm.slane %v380, 0
    %383 = vrot.lane.b32.xlu0 %v382, 64
    %v384 = vpop.permute.xlu0 %383
    %s386 = scalar_lea.vmem [#allocation2], 2
    %387 = vst.msk [vmem:[%s386] sm:$0x1] %vm256, %v384
    %v388 = vpack.c.bf16 %v380, %v380
    %390 = vrot.lane.b32.xlu0 %v388, 64
    %v391 = vpop.permute.xlu0 %390
    %v393 = vsel %vm143, %v391, 0
    %395 = vmatpush.bf16.msra.mxu0 0
    %396 = vmatpush.bf16.msra.mxu0 0
    %397 = vmatpush.bf16.msra.mxu0 0
    %398 = vmatpush.bf16.msra.mxu0 0
    %399 = vmatpush.bf16.msra.mxu0 0
    %400 = vmatpush.bf16.msra.mxu0 0
    %401 = vmatpush.bf16.msra.mxu0 %v194
    %402 = vmatpush.bf16.msra.mxu0 %v193
    %403 = vmatmul.bf16.gmra.mxu0 %v393
    %v404 = vpop.f32.mrf.mxu0
    %v405 = vadd.f32 0.0, %v404
    %v406 = vpop.f32.mrf.mxu0
    %407 = vdwg.mxu0
    %v408 = vadd.f32 %v169, %v405
    %v409 = vxor.u32 %v408, 2147483648
    %v410 = vmul.f32 %v409, 1.442695
    %v411 = vpow.pop %v410
    %v412 = vadd.f32 %v411, 1.0
    %v413 = vrcp.pop %v412
    %v414 = vmul.f32 %v412, %v413
    %v415 = vsub.f32 1.0, %v414
    %v416 = vmul.f32 %v413, %v415
    %v417 = vadd.f32 %v413, %v416
    %vm418 = vweird.f32 %v412
    %vm419 = vweird.f32 %v413
    %vm420 = vmor %vm418, %vm419
    %v421 = vsel %vm420, %v413, %v417
    %v422 = vand.u32 2147483647, %v412
    %vm423 = vcmp.eq.f32.partialorder %v422, 8.507059e+37
    %v424 = vand.u32 %v412, 2147483648
    %v425 = vor.u32 1.1754944e-38, %v424
    %v426 = vsel %vm423, %v425, %v421
    %v427 = vmul.f32 1.0, %v426
    %v428 = vtanh.pop %v408
    %v429 = vmul.f32 %v427, %v374
    %431 = vrot.lane.b32.xlu0 %v428, 32
    %v432 = vpop.permute.xlu0 %431
    %v434 = vmul.f32 %v427, %v432
    %436 = vrot.lane.b32.xlu0 %v434, 32
    %v437 = vpop.permute.xlu0 %436
    %v439 = vadd.f32 %v429, %v437
    %v440 = vtanh.pop %v439
    %442 = vrot.lane.b32.xlu0 %v440, 32
    %v443 = vpop.permute.xlu0 %442
    %v445 = vmul.f32 %v427, %v443
    %v447 = vperm.slane %v445, 0
    %448 = vrot.lane.b32.xlu0 %v447, 64
    %v449 = vpop.permute.xlu0 %448
    %s451 = scalar_lea.vmem [#allocation2], 3
    %452 = vst.msk [vmem:[%s451] sm:$0x1] %vm256, %v449
    %v453 = vpack.c.bf16 %v445, %v445
    %455 = vrot.lane.b32.xlu0 %v453, 64
    %v456 = vpop.permute.xlu0 %455
    %v458 = vsel %vm143, %v456, 0
    %460 = vmatpush.bf16.msra.mxu0 0
    %461 = vmatpush.bf16.msra.mxu0 0
    %462 = vmatpush.bf16.msra.mxu0 0
    %463 = vmatpush.bf16.msra.mxu0 0
    %464 = vmatpush.bf16.msra.mxu0 0
    %465 = vmatpush.bf16.msra.mxu0 0
    %466 = vmatpush.bf16.msra.mxu0 %v194
    %467 = vmatpush.bf16.msra.mxu0 %v193
    %468 = vmatmul.bf16.gmra.mxu0 %v458
    %v469 = vpop.f32.mrf.mxu0
    %v470 = vadd.f32 0.0, %v469
    %v471 = vpop.f32.mrf.mxu0
    %472 = vdwg.mxu0
    %v473 = vadd.f32 %v170, %v470
    %v474 = vxor.u32 %v473, 2147483648
    %v475 = vmul.f32 %v474, 1.442695
    %v476 = vpow.pop %v475
    %v477 = vadd.f32 %v476, 1.0
    %v478 = vrcp.pop %v477
    %v479 = vmul.f32 %v477, %v478
    %v480 = vsub.f32 1.0, %v479
    %v481 = vmul.f32 %v478, %v480
    %v482 = vadd.f32 %v478, %v481
    %vm483 = vweird.f32 %v477
    %vm484 = vweird.f32 %v478
    %vm485 = vmor %vm483, %vm484
    %v486 = vsel %vm485, %v478, %v482
    %v487 = vand.u32 2147483647, %v477
    %vm488 = vcmp.eq.f32.partialorder %v487, 8.507059e+37
    %v489 = vand.u32 %v477, 2147483648
    %v490 = vor.u32 1.1754944e-38, %v489
    %v491 = vsel %vm488, %v490, %v486
    %v492 = vmul.f32 1.0, %v491
    %v493 = vtanh.pop %v473
    %v494 = vmul.f32 %v492, %v439
    %496 = vrot.lane.b32.xlu0 %v493, 32
    %v497 = vpop.permute.xlu0 %496
    %v499 = vmul.f32 %v492, %v497
    %501 = vrot.lane.b32.xlu0 %v499, 32
    %v502 = vpop.permute.xlu0 %501
    %v504 = vadd.f32 %v494, %v502
    %v505 = vtanh.pop %v504
    %507 = vrot.lane.b32.xlu0 %v505, 32
    %v508 = vpop.permute.xlu0 %507
    %v510 = vmul.f32 %v492, %v508
    %v512 = vperm.slane %v510, 0
    %513 = vrot.lane.b32.xlu0 %v512, 64
    %v514 = vpop.permute.xlu0 %513
    %s516 = scalar_lea.vmem [#allocation2], 4
    %517 = vst.msk [vmem:[%s516] sm:$0x1] %vm256, %v514
    %v518 = vpack.c.bf16 %v510, %v510
    %520 = vrot.lane.b32.xlu0 %v518, 64
    %v521 = vpop.permute.xlu0 %520
    %v523 = vsel %vm143, %v521, 0
    %525 = vmatpush.bf16.msra.mxu0 0
    %526 = vmatpush.bf16.msra.mxu0 0
    %527 = vmatpush.bf16.msra.mxu0 0
    %528 = vmatpush.bf16.msra.mxu0 0
    %529 = vmatpush.bf16.msra.mxu0 0
    %530 = vmatpush.bf16.msra.mxu0 0
    %531 = vmatpush.bf16.msra.mxu0 %v194
    %532 = vmatpush.bf16.msra.mxu0 %v193
    %533 = vmatmul.bf16.gmra.mxu0 %v523
    %v534 = vpop.f32.mrf.mxu0
    %v535 = vadd.f32 0.0, %v534
    %v536 = vpop.f32.mrf.mxu0
    %537 = vdwg.mxu0
    %v538 = vadd.f32 %v171, %v535
    %v539 = vxor.u32 %v538, 2147483648
    %v540 = vmul.f32 %v539, 1.442695
    %v541 = vpow.pop %v540
    %v542 = vadd.f32 %v541, 1.0
    %v543 = vrcp.pop %v542
    %v544 = vmul.f32 %v542, %v543
    %v545 = vsub.f32 1.0, %v544
    %v546 = vmul.f32 %v543, %v545
    %v547 = vadd.f32 %v543, %v546
    %vm548 = vweird.f32 %v542
    %vm549 = vweird.f32 %v543
    %vm550 = vmor %vm548, %vm549
    %v551 = vsel %vm550, %v543, %v547
    %v552 = vand.u32 2147483647, %v542
    %vm553 = vcmp.eq.f32.partialorder %v552, 8.507059e+37
    %v554 = vand.u32 %v542, 2147483648
    %v555 = vor.u32 1.1754944e-38, %v554
    %v556 = vsel %vm553, %v555, %v551
    %v557 = vmul.f32 1.0, %v556
    %v558 = vtanh.pop %v538
    %v559 = vmul.f32 %v557, %v504
    %561 = vrot.lane.b32.xlu0 %v558, 32
    %v562 = vpop.permute.xlu0 %561
    %v564 = vmul.f32 %v557, %v562
    %566 = vrot.lane.b32.xlu0 %v564, 32
    %v567 = vpop.permute.xlu0 %566
    %v569 = vadd.f32 %v559, %v567
    %v570 = vtanh.pop %v569
    %572 = vrot.lane.b32.xlu0 %v570, 32
    %v573 = vpop.permute.xlu0 %572
    %v575 = vmul.f32 %v557, %v573
    %v577 = vperm.slane %v575, 0
    %578 = vrot.lane.b32.xlu0 %v577, 64
    %v579 = vpop.permute.xlu0 %578
    %s581 = scalar_lea.vmem [#allocation2], 5
    %582 = vst.msk [vmem:[%s581] sm:$0x1] %vm256, %v579
    %v583 = vpack.c.bf16 %v575, %v575
    %585 = vrot.lane.b32.xlu0 %v583, 64
    %v586 = vpop.permute.xlu0 %585
    %v588 = vsel %vm143, %v586, 0
    %590 = vmatpush.bf16.msra.mxu0 0
    %591 = vmatpush.bf16.msra.mxu0 0
    %592 = vmatpush.bf16.msra.mxu0 0
    %593 = vmatpush.bf16.msra.mxu0 0
    %594 = vmatpush.bf16.msra.mxu0 0
    %595 = vmatpush.bf16.msra.mxu0 0
    %596 = vmatpush.bf16.msra.mxu0 %v194
    %597 = vmatpush.bf16.msra.mxu0 %v193
    %598 = vmatmul.bf16.gmra.mxu0 %v588
    %v599 = vpop.f32.mrf.mxu0
    %v600 = vadd.f32 0.0, %v599
    %v601 = vpop.f32.mrf.mxu0
    %602 = vdwg.mxu0
    %v603 = vadd.f32 %v172, %v600
    %v604 = vxor.u32 %v603, 2147483648
    %v605 = vmul.f32 %v604, 1.442695
    %v606 = vpow.pop %v605
    %v607 = vadd.f32 %v606, 1.0
    %v608 = vrcp.pop %v607
    %v609 = vmul.f32 %v607, %v608
    %v610 = vsub.f32 1.0, %v609
    %v611 = vmul.f32 %v608, %v610
    %v612 = vadd.f32 %v608, %v611
    %vm613 = vweird.f32 %v607
    %vm614 = vweird.f32 %v608
    %vm615 = vmor %vm613, %vm614
    %v616 = vsel %vm615, %v608, %v612
    %v617 = vand.u32 2147483647, %v607
    %vm618 = vcmp.eq.f32.partialorder %v617, 8.507059e+37
    %v619 = vand.u32 %v607, 2147483648
    %v620 = vor.u32 1.1754944e-38, %v619
    %v621 = vsel %vm618, %v620, %v616
    %v622 = vmul.f32 1.0, %v621
    %v623 = vtanh.pop %v603
    %v624 = vmul.f32 %v622, %v569
    %626 = vrot.lane.b32.xlu0 %v623, 32
    %v627 = vpop.permute.xlu0 %626
    %v629 = vmul.f32 %v622, %v627
    %631 = vrot.lane.b32.xlu0 %v629, 32
    %v632 = vpop.permute.xlu0 %631
    %v634 = vadd.f32 %v624, %v632
    %v635 = vtanh.pop %v634
    %637 = vrot.lane.b32.xlu0 %v635, 32
    %v638 = vpop.permute.xlu0 %637
    %v640 = vmul.f32 %v622, %v638
    %v642 = vperm.slane %v640, 0
    %643 = vrot.lane.b32.xlu0 %v642, 64
    %v644 = vpop.permute.xlu0 %643
    %s646 = scalar_lea.vmem [#allocation2], 6
    %647 = vst.msk [vmem:[%s646] sm:$0x1] %vm256, %v644
    %v648 = vpack.c.bf16 %v640, %v640
    %650 = vrot.lane.b32.xlu0 %v648, 64
    %v651 = vpop.permute.xlu0 %650
    %v653 = vsel %vm143, %v651, 0
    %655 = vmatpush.bf16.msra.mxu0 0
    %656 = vmatpush.bf16.msra.mxu0 0
    %657 = vmatpush.bf16.msra.mxu0 0
    %658 = vmatpush.bf16.msra.mxu0 0
    %659 = vmatpush.bf16.msra.mxu0 0
    %660 = vmatpush.bf16.msra.mxu0 0
    %661 = vmatpush.bf16.msra.mxu0 %v194
    %662 = vmatpush.bf16.msra.mxu0 %v193
    %663 = vmatmul.bf16.gmra.mxu0 %v653
    %v664 = vpop.f32.mrf.mxu0
    %v665 = vadd.f32 0.0, %v664
    %v666 = vpop.f32.mrf.mxu0
    %667 = vdwg.mxu0
    %v668 = vadd.f32 %v173, %v665
    %v669 = vxor.u32 %v668, 2147483648
    %v670 = vmul.f32 %v669, 1.442695
    %v671 = vpow.pop %v670
    %v672 = vadd.f32 %v671, 1.0
    %v673 = vrcp.pop %v672
    %v674 = vmul.f32 %v672, %v673
    %v675 = vsub.f32 1.0, %v674
    %v676 = vmul.f32 %v673, %v675
    %v677 = vadd.f32 %v673, %v676
    %vm678 = vweird.f32 %v672
    %vm679 = vweird.f32 %v673
    %vm680 = vmor %vm678, %vm679
    %v681 = vsel %vm680, %v673, %v677
    %v682 = vand.u32 2147483647, %v672
    %vm683 = vcmp.eq.f32.partialorder %v682, 8.507059e+37
    %v684 = vand.u32 %v672, 2147483648
    %v685 = vor.u32 1.1754944e-38, %v684
    %v686 = vsel %vm683, %v685, %v681
    %v687 = vmul.f32 1.0, %v686
    %v688 = vtanh.pop %v668
    %v689 = vmul.f32 %v687, %v634
    %691 = vrot.lane.b32.xlu0 %v688, 32
    %v692 = vpop.permute.xlu0 %691
    %v694 = vmul.f32 %v687, %v692
    %696 = vrot.lane.b32.xlu0 %v694, 32
    %v697 = vpop.permute.xlu0 %696
    %v699 = vadd.f32 %v689, %v697
    %v700 = vtanh.pop %v699
    %702 = vrot.lane.b32.xlu0 %v700, 32
    %v703 = vpop.permute.xlu0 %702
    %v705 = vmul.f32 %v687, %v703
    %v707 = vperm.slane %v705, 0
    %708 = vrot.lane.b32.xlu0 %v707, 64
    %v709 = vpop.permute.xlu0 %708
    %s711 = scalar_lea.vmem [#allocation2], 7
    %712 = vst.msk [vmem:[%s711] sm:$0x1] %vm256, %v709
    %v713 = vld [vmem:[#allocation2] sm:$0x1]
    %v714 = vld [vmem:[#allocation2 + $0x1] sm:$0x1]
    %v715 = vld [vmem:[#allocation2 + $0x2] sm:$0x1]
    %v716 = vld [vmem:[#allocation2 + $0x3] sm:$0x1]
    %v717 = vld [vmem:[#allocation2 + $0x4] sm:$0x1]
    %v718 = vld [vmem:[#allocation2 + $0x5] sm:$0x1]
    %v719 = vld [vmem:[#allocation2 + $0x6] sm:$0x1]
    %v720 = vld [vmem:[#allocation2 + $0x7] sm:$0x1]
    %v721 = vld [vmem:[#allocation9] sm:$0xff]
    %v722 = vld [vmem:[#allocation9 + $0x8] sm:$0xff]
    %v723 = vld [vmem:[#allocation9 + $0x10] sm:$0xff]
    %v724 = vld [vmem:[#allocation9 + $0x18] sm:$0xff]
    %v725 = vld [vmem:[%s5] sm:$0x1]
    %734 = vst [vmem:[#allocation1] ss:$9 sm:$0xff] %v713
    %s735 = scalar_lea.vmem [#allocation1], 1
    %736 = vst [vmem:[%s735] ss:$9 sm:$0xff] %v714
    %s737 = scalar_lea.vmem [#allocation1], 2
    %738 = vst [vmem:[%s737] ss:$9 sm:$0xff] %v715
    %s739 = scalar_lea.vmem [#allocation1], 3
    %740 = vst [vmem:[%s739] ss:$9 sm:$0xff] %v716
    %s741 = scalar_lea.vmem [#allocation1], 4
    %742 = vst [vmem:[%s741] ss:$9 sm:$0xff] %v717
    %s743 = scalar_lea.vmem [#allocation1], 5
    %744 = vst [vmem:[%s743] ss:$9 sm:$0xff] %v718
    %s745 = scalar_lea.vmem [#allocation1], 6
    %746 = vst [vmem:[%s745] ss:$9 sm:$0xff] %v719
    %s747 = scalar_lea.vmem [#allocation1], 7
    %748 = vst [vmem:[%s747] ss:$9 sm:$0xff] %v720
    %v749 = vld [vmem:[#allocation1] sm:$0xff]
    %751 = vst [vmem:[#allocation1] ss:$9 sm:$0xff] %v725
    %s752 = scalar_lea.vmem [#allocation1], 1
    %753 = vst [vmem:[%s752] ss:$9 sm:$0xff] %v725
    %s754 = scalar_lea.vmem [#allocation1], 2
    %755 = vst [vmem:[%s754] ss:$9 sm:$0xff] %v725
    %s756 = scalar_lea.vmem [#allocation1], 3
    %757 = vst [vmem:[%s756] ss:$9 sm:$0xff] %v725
    %s758 = scalar_lea.vmem [#allocation1], 4
    %759 = vst [vmem:[%s758] ss:$9 sm:$0xff] %v725
    %s760 = scalar_lea.vmem [#allocation1], 5
    %761 = vst [vmem:[%s760] ss:$9 sm:$0xff] %v725
    %s762 = scalar_lea.vmem [#allocation1], 6
    %763 = vst [vmem:[%s762] ss:$9 sm:$0xff] %v725
    %s764 = scalar_lea.vmem [#allocation1], 7
    %765 = vst [vmem:[%s764] ss:$9 sm:$0xff] %v725
    %v766 = vld [vmem:[#allocation1] sm:$0xff]
    %v768 = vsel %vm143, %v749, 0
    %770 = vmatpush.msra.mxu0 0.0
    %771 = vmatpush.msra.mxu0 0.0
    %772 = vmatpush.msra.mxu0 0.0
    %773 = vmatpush.msra.mxu0 0.0
    %774 = vmatpush.msra.mxu0 0.0
    %775 = vmatpush.msra.mxu0 0.0
    %776 = vmatpush.msra.mxu0 0.0
    %777 = vmatpush.msra.mxu0 0.0
    %778 = vmatpush.msra.mxu0 0.0
    %779 = vmatpush.msra.mxu0 0.0
    %780 = vmatpush.msra.mxu0 0.0
    %781 = vmatpush.msra.mxu0 0.0
    %782 = vmatpush.msra.mxu0 %v724
    %783 = vmatpush.msra.mxu0 %v723
    %784 = vmatpush.msra.mxu0 %v722
    %785 = vmatpush.msra.mxu0 %v721
    %786 = vmatmul.f32.gmra.mxu0 %v768
    %v787 = vpop.f32.mrf.mxu0
    %v788 = vadd.f32 %v766, %v787
    %789 = vdwg.mxu0
    %v791 = vrot.slane %v788, 1
    %v792 = vrot.slane %v788, 2
    %v793 = vrot.slane %v788, 3
    %v794 = vrot.slane %v788, 4
    %v795 = vrot.slane %v788, 5
    %v796 = vrot.slane %v788, 6
    %v797 = vrot.slane %v788, 7
    %vm805 = vcmask 1040384
    %v806 = vsel %vm805, %v788, -inf
    %807 = vmax.xlane.f32.xlu0 %v806
    %v808 = vpop.xlane.xlu0 %807
    %v809 = vsel %vm805, %v791, -inf
    %810 = vmax.xlane.f32.xlu0 %v809
    %v811 = vpop.xlane.xlu0 %810
    %v812 = vsel %vm805, %v792, -inf
    %813 = vmax.xlane.f32.xlu0 %v812
    %v814 = vpop.xlane.xlu0 %813
    %v815 = vsel %vm805, %v793, -inf
    %816 = vmax.xlane.f32.xlu0 %v815
    %v817 = vpop.xlane.xlu0 %816
    %v818 = vsel %vm805, %v794, -inf
    %819 = vmax.xlane.f32.xlu0 %v818
    %v820 = vpop.xlane.xlu0 %819
    %v821 = vsel %vm805, %v795, -inf
    %822 = vmax.xlane.f32.xlu0 %v821
    %v823 = vpop.xlane.xlu0 %822
    %v824 = vsel %vm805, %v796, -inf
    %825 = vmax.xlane.f32.xlu0 %v824
    %v826 = vpop.xlane.xlu0 %825
    %v827 = vsel %vm805, %v797, -inf
    %828 = vmax.xlane.f32.xlu0 %v827
    %v829 = vpop.xlane.xlu0 %828
    %v830 = vsub.f32 %v788, %v808
    %v831 = vsub.f32 %v791, %v811
    %v832 = vsub.f32 %v792, %v814
    %v833 = vsub.f32 %v793, %v817
    %v834 = vsub.f32 %v794, %v820
    %v835 = vsub.f32 %v795, %v823
    %v836 = vsub.f32 %v796, %v826
    %v837 = vsub.f32 %v797, %v829
    %v838 = vmul.f32 %v830, 1.442695
    %v839 = vpow.pop %v838
    %v840 = vmul.f32 %v831, 1.442695
    %v841 = vpow.pop %v840
    %v842 = vmul.f32 %v832, 1.442695
    %v843 = vpow.pop %v842
    %v844 = vmul.f32 %v833, 1.442695
    %v845 = vpow.pop %v844
    %v846 = vmul.f32 %v834, 1.442695
    %v847 = vpow.pop %v846
    %v848 = vmul.f32 %v835, 1.442695
    %v849 = vpow.pop %v848
    %v850 = vmul.f32 %v836, 1.442695
    %v851 = vpow.pop %v850
    %v852 = vmul.f32 %v837, 1.442695
    %v853 = vpow.pop %v852
    %v854 = vsel %vm805, %v839, 0.0
    %855 = vadd.xlane.f32.xlu0 %v854
    %v856 = vpop.xlane.xlu0 %855
    %v857 = vsel %vm805, %v841, 0.0
    %858 = vadd.xlane.f32.xlu0 %v857
    %v859 = vpop.xlane.xlu0 %858
    %v860 = vsel %vm805, %v843, 0.0
    %861 = vadd.xlane.f32.xlu0 %v860
    %v862 = vpop.xlane.xlu0 %861
    %v863 = vsel %vm805, %v845, 0.0
    %864 = vadd.xlane.f32.xlu0 %v863
    %v865 = vpop.xlane.xlu0 %864
    %v866 = vsel %vm805, %v847, 0.0
    %867 = vadd.xlane.f32.xlu0 %v866
    %v868 = vpop.xlane.xlu0 %867
    %v869 = vsel %vm805, %v849, 0.0
    %870 = vadd.xlane.f32.xlu0 %v869
    %v871 = vpop.xlane.xlu0 %870
    %v872 = vsel %vm805, %v851, 0.0
    %873 = vadd.xlane.f32.xlu0 %v872
    %v874 = vpop.xlane.xlu0 %873
    %v875 = vsel %vm805, %v853, 0.0
    %876 = vadd.xlane.f32.xlu0 %v875
    %v877 = vpop.xlane.xlu0 %876
    %v878 = vlog2.pop %v856
    %v879 = vmul.f32 %v878, 0.6931472
    %v880 = vlog2.pop %v859
    %v881 = vmul.f32 %v880, 0.6931472
    %v882 = vlog2.pop %v862
    %v883 = vmul.f32 %v882, 0.6931472
    %v884 = vlog2.pop %v865
    %v885 = vmul.f32 %v884, 0.6931472
    %v886 = vlog2.pop %v868
    %v887 = vmul.f32 %v886, 0.6931472
    %v888 = vlog2.pop %v871
    %v889 = vmul.f32 %v888, 0.6931472
    %v890 = vlog2.pop %v874
    %v891 = vmul.f32 %v890, 0.6931472
    %v892 = vlog2.pop %v877
    %v893 = vmul.f32 %v892, 0.6931472
    %v894 = vsub.f32 %v830, %v879
    %v895 = vsub.f32 %v831, %v881
    %v896 = vsub.f32 %v832, %v883
    %v897 = vsub.f32 %v833, %v885
    %v898 = vsub.f32 %v834, %v887
    %v899 = vsub.f32 %v835, %v889
    %v900 = vsub.f32 %v836, %v891
    %v901 = vsub.f32 %v837, %v893
    %902 = vst [vmem:[#allocation11] sm:$0x1] %v894
    %903 = vst [vmem:[#allocation11 + $0x1] sm:$0x1] %v895
    %904 = vst [vmem:[#allocation11 + $0x2] sm:$0x1] %v896
    %905 = vst [vmem:[#allocation11 + $0x3] sm:$0x1] %v897
    %906 = vst [vmem:[#allocation11 + $0x4] sm:$0x1] %v898
    %907 = vst [vmem:[#allocation11 + $0x5] sm:$0x1] %v899
    %908 = vst [vmem:[#allocation11 + $0x6] sm:$0x1] %v900
    %909 = vst [vmem:[#allocation11 + $0x7] sm:$0x1] %v901
    // Predicated region
    $region42: #{lstm_tagger_forward_batched.1} parent=1 // pred_check
      _
    $region43: #{lstm_tagger_forward_batched.1} parent=1 // pred_check_branch
      %911 = sbr.rel (0) target = $region45
    $region44: #{lstm_tagger_forward_batched.1} parent=1 // pred_region
      %913 = vsyncadd [#allocation5], 0
      %s914 = sshll.u32 [#allocation11], 4
      %s915 = int_to_ptr.vmem [resolvable:$true] %s914
      %s916 = sshll.u32 %s6, 4
      %s917 = int_to_ptr.hbm [resolvable:$true] %s916
      %922 = dma.vmem_to_hbm [thread:$0]  %s915, 128, %s917, [#allocation5], 16, 16, 1
    $region45: #{lstm_tagger_forward_batched.1} parent=1 // pred_fallthru
      _
    // Predicated region
    $region46: #{lstm_tagger_forward_batched.1} parent=1 // pred_check
      _
    $region47: #{lstm_tagger_forward_batched.1} parent=1 // pred_check_branch
      %924 = sbr.rel (0) target = $region49
    $region48: #{lstm_tagger_forward_batched.1} parent=1 // pred_region
      %926 = dma.done [#allocation5], 128
    $region49: #{lstm_tagger_forward_batched.1} parent=1 // pred_fallthru
      _
    %927 = vsyncpa [#allocation4], 1
    %928 = vsyncpa [#allocation7], 1
    %929 = vsyncpa [#allocation10], 1
    %930 = vsyncpa [#allocation5], 1

</llo_original>
